<compile_context>
chip_gen: v7x
topology: tpu7x:2x2x1
jax: 0.10.0
libtpu: 0.0.40
codegen_flags: <defaults>
</compile_context>

<pallas_src>
import functools

import jax
import jax.numpy as jnp
from jax.experimental import pallas as pl
from jax.experimental.pallas import tpu as pltpu

_NEG = -1e30                 # class/row padding value: vanishes under max / exp
_LANE = 128
_SUBLANE = 8
_MAX_TILE_ROWS = 1024        # row-tile cap
_MAX_BLOCK_BYTES = 4 << 20   # logits-block budget (x2 for double buffering)


def _round_up(x, m):
    return (x + m - 1) // m * m


def _fused_ce_kernel(logits_ref, target_ref, weight_ref, loss_ref,
                     m_sc, l_sc, tgt_sc, *, inv_temperature):
    """Online (flash-style) weighted softmax-CE over one [T, Ck] logits tile."""
    k = pl.program_id(1)
    num_k = pl.num_programs(1)

    @pl.when(k == 0)
    def _():
        m_sc[...] = jnp.full_like(m_sc, -jnp.inf)
        l_sc[...] = jnp.zeros_like(l_sc)
        tgt_sc[...] = jnp.zeros_like(tgt_sc)

    logits = logits_ref[...].astype(jnp.float32) * inv_temperature     # [T, Ck]
    t, ck = logits.shape

    # Gather the target logit with a one-hot compare against the *global* class id
    # (no dynamic gather on TPU).  Padding lanes never match a real target.
    col = jax.lax.broadcasted_iota(jnp.int32, (t, ck), 1) + k * ck
    onehot = col == target_ref[...]                                     # [T, Ck]
    tgt_sc[...] += jnp.sum(jnp.where(onehot, logits, 0.0),
                           axis=-1, keepdims=True)

    # Running numerically-stable logsumexp across class tiles.
    m_prev = m_sc[...]
    m_new = jnp.maximum(m_prev, jnp.max(logits, axis=-1, keepdims=True))
    l_sc[...] = (jnp.exp(m_prev - m_new) * l_sc[...]
                 + jnp.sum(jnp.exp(logits - m_new), axis=-1, keepdims=True))
    m_sc[...] = m_new

    @pl.when(k == num_k - 1)
    def _():
        # weight already folds (T/base_T), 1/N and the 1/len(num_cluster) average;
        # padded rows carry weight 0 so they contribute exactly 0.
        per_row = (m_sc[...] + jnp.log(l_sc[...]) - tgt_sc[...]) * weight_ref[...]
        total = jnp.sum(per_row)
        r = jax.lax.broadcasted_iota(jnp.int32, (_SUBLANE, _LANE), 0)
        c = jax.lax.broadcasted_iota(jnp.int32, (_SUBLANE, _LANE), 1)
        loss_ref[...] = jnp.where((r == 0) & (c == 0), total, 0.0)


def pallas_pce_loss(logits_list, target_list, weight_list, inv_temperature):
    """sum_r w_r * (logsumexp(logits_r / T) - (logits_r / T)[target_r])."""
    dtype = logits_list[0].dtype
    itemsize = jnp.dtype(dtype).itemsize

    # Row tiling: stack all heads along the sublane axis.
    rows = sum(int(x.shape[0]) for x in logits_list)
    tile_rows = min(_MAX_TILE_ROWS, _round_up(rows, _SUBLANE))
    rows_pad = _round_up(rows, tile_rows)
    num_row_tiles = rows_pad // tile_rows

    # Class tiling: lane-dense, bounded block bytes, tile_c divides c_pad.
    max_c = max(int(x.shape[1]) for x in logits_list)
    c_pad = _round_up(max_c, _LANE)
    budget_c = max(_LANE,
                   (_MAX_BLOCK_BYTES // (tile_rows * itemsize)) // _LANE * _LANE)
    tile_c = min(c_pad, budget_c)
    c_pad = _round_up(c_pad, tile_c)
    num_c_tiles = c_pad // tile_c

    # Wrapper-side layout plumbing (done once): pad classes with _NEG, stack heads
    # on the sublane axis, build per-row targets / weights (padded rows: weight 0).
    slab_parts, tgt_parts, wgt_parts = [], [], []
    for logits, tgt, w in zip(logits_list, target_list, weight_list):
        n, c = logits.shape
        slab_parts.append(
            jnp.pad(logits.astype(dtype), ((0, 0), (0, c_pad - c)),
                    constant_values=_NEG))
        tgt_parts.append(tgt.reshape(n, 1).astype(jnp.int32))
        wgt_parts.append(jnp.full((n, 1), w, jnp.float32))
    pad_rows = rows_pad - rows
    if pad_rows:
        slab_parts.append(jnp.full((pad_rows, c_pad), _NEG, dtype))
        tgt_parts.append(jnp.zeros((pad_rows, 1), jnp.int32))
        wgt_parts.append(jnp.zeros((pad_rows, 1), jnp.float32))
    slab = jnp.concatenate(slab_parts, axis=0)          # [rows_pad, c_pad]
    tgts = jnp.concatenate(tgt_parts, axis=0)           # [rows_pad, 1] int32
    wgts = jnp.concatenate(wgt_parts, axis=0)           # [rows_pad, 1] f32

    cost = pl.CostEstimate(
        flops=6 * rows_pad * c_pad,
        transcendentals=rows_pad * (c_pad + 1),
        bytes_accessed=(rows_pad * c_pad * itemsize + rows_pad * 8
                        + num_row_tiles * _SUBLANE * _LANE * 4),
    )

    kernel = functools.partial(_fused_ce_kernel, inv_temperature=inv_temperature)
    per_tile = pl.pallas_call(
        kernel,
        out_shape=jax.ShapeDtypeStruct((num_row_tiles * _SUBLANE, _LANE),
                                       jnp.float32),
        grid=(num_row_tiles, num_c_tiles),
        in_specs=[
            pl.BlockSpec((tile_rows, tile_c), lambda i, k: (i, k)),
            pl.BlockSpec((tile_rows, 1), lambda i, k: (i, 0)),
            pl.BlockSpec((tile_rows, 1), lambda i, k: (i, 0)),
        ],
        out_specs=pl.BlockSpec((_SUBLANE, _LANE), lambda i, k: (i, 0)),
        scratch_shapes=[pltpu.VMEM((tile_rows, 1), jnp.float32),   # running max
                        pltpu.VMEM((tile_rows, 1), jnp.float32),   # running sum-exp
                        pltpu.VMEM((tile_rows, 1), jnp.float32)],  # target logit
        compiler_params=pltpu.CompilerParams(
            dimension_semantics=("parallel", "arbitrary")),
        cost_estimate=cost,
    )(slab, tgts, wgts)

    # Tiny lane-dense final reduce; the weights already normalize everything.
    return jnp.sum(per_tile)


class PCE:
    """JAX/Pallas re-implementation of the PyTorch PCE loss module."""

    def __init__(self, configer=None):
        # deterministic, in-script "configer"
        self.configer = configer or {"contrast": {"base_temperature": 0.07}}
        self.temperature = 0.1
        self.base_temperature = self.configer["contrast"]["base_temperature"]

    def __call__(self, output, target, output_proto=None, target_proto=None,
                 num_cluster=None):
        scale = self.temperature / self.base_temperature
        inv_t = 1.0 / self.temperature

        # head 0: instance CE, mean over the batch
        logits_list = [output]
        target_list = [target]
        weight_list = [scale / output.shape[0]]

        if output_proto is not None:
            n_heads = len(num_cluster) if num_cluster is not None else len(output_proto)
            for proto_out, proto_tgt in zip(output_proto, target_proto):
                logits_list.append(proto_out)
                target_list.append(proto_tgt)
                # per-head mean, then averaged over len(num_cluster) heads
                weight_list.append(scale / (proto_out.shape[0] * n_heads))
                # TODO(synk): accuracy()/AverageMeter updates (acc_proto, acc_inst,
                # losses) are logging-side-effects only; not part of returned loss.

        loss = pallas_pce_loss(logits_list, target_list, weight_list, inv_t)

        loss_contrast = jnp.float32(0.0)
        return loss + 0.0 * loss_contrast


def _ce_ref(logits, target, temperature, base_temperature):
    """Pure-JAX reference for correctness checking."""
    x = logits.astype(jnp.float32) / temperature
    lse = jax.nn.logsumexp(x, axis=-1)
    tgt_logit = jnp.take_along_axis(x, target[:, None].astype(jnp.int32), axis=-1)[:, 0]
    return (temperature / base_temperature) * jnp.mean(lse - tgt_logit)


if __name__ == "__main__":
    key = jax.random.PRNGKey(0)
    k1, k2, k3, k4, k5, k6 = jax.random.split(key, 6)

    N = 8                   # batch
    K_INST = 32             # instance classes
    NUM_CLUSTER = [16, 24]  # prototype cluster counts

    output = jax.random.normal(k1, (N, K_INST), dtype=jnp.float32)
    target = jax.random.randint(k2, (N,), 0, K_INST, dtype=jnp.int32)

    output_proto = [
        jax.random.normal(k3, (N, NUM_CLUSTER[0]), dtype=jnp.float32),
        jax.random.normal(k4, (N, NUM_CLUSTER[1]), dtype=jnp.float32),
    ]
    target_proto = [
        jax.random.randint(k5, (N,), 0, NUM_CLUSTER[0], dtype=jnp.int32),
        jax.random.randint(k6, (N,), 0, NUM_CLUSTER[1], dtype=jnp.int32),
    ]

    pce = PCE()
    loss = pce(output, target, output_proto=output_proto,
               target_proto=target_proto, num_cluster=NUM_CLUSTER)
    loss = jax.block_until_ready(loss)

    # correctness check against pure-JAX reference
    ref = _ce_ref(output, target, pce.temperature, pce.base_temperature)
    ref_proto = sum(_ce_ref(po, pt, pce.temperature, pce.base_temperature)
                    for po, pt in zip(output_proto, target_proto)) / len(NUM_CLUSTER)
    ref_total = ref + ref_proto
    assert jnp.allclose(loss, ref_total, rtol=1e-4, atol=1e-4), (loss, ref_total)

    print("KERNEL_OK")
</pallas_src>

<mosaic_0001>
module attributes {stable_mosaic.version = 11 : i64} {
  func.func @_fused_ce_kernel(%arg0: i32, %arg1: i32, %arg2: memref<24x128xf32, #tpu.memory_space<vmem>>, %arg3: memref<24x1xi32, #tpu.memory_space<vmem>>, %arg4: memref<24x1xf32, #tpu.memory_space<vmem>>, %arg5: memref<8x128xf32, #tpu.memory_space<vmem>>, %arg6: memref<24x1xf32, #tpu.memory_space<vmem>>, %arg7: memref<24x1xf32, #tpu.memory_space<vmem>>, %arg8: memref<24x1xf32, #tpu.memory_space<vmem>>) attributes {dimension_semantics = [#tpu.dimension_semantics<parallel>, #tpu.dimension_semantics<arbitrary>], iteration_bounds = array<i64: 1, 1>, scalar_prefetch = 0 : i64, scratch_operands = 3 : i64, tpu.core_type = #tpu.core_type<tc>, window_params = [{transform_indices = @transform_0, window_bounds = array<i64: 24, 128>}, {transform_indices = @transform_1, window_bounds = array<i64: 24, 1>}, {transform_indices = @transform_2, window_bounds = array<i64: 24, 1>}, {transform_indices = @transform_3, window_bounds = array<i64: 8, 128>}]} {
    %c0_i32 = arith.constant 0 : i32
    %0 = arith.cmpi eq, %arg1, %c0_i32 : i32
    %1 = arith.extui %0 : i1 to i32
    %c0_i32_0 = arith.constant 0 : i32
    %2 = arith.cmpi ne, %1, %c0_i32_0 : i32
    scf.if %2 {
      %cst_22 = arith.constant 0xFF800000 : f32
      %39 = vector.broadcast %cst_22 : f32 to vector<24x1xf32>
      %c0_23 = arith.constant 0 : index
      %c0_24 = arith.constant 0 : index
      %40 = vector.load %arg6[%c0_23, %c0_24] : memref<24x1xf32, #tpu.memory_space<vmem>>, vector<24x1xf32>
      tpu.vector_store %arg6[%c0_23, %c0_24], %39 {strides = array<i32>} : memref<24x1xf32, #tpu.memory_space<vmem>>, vector<24x1xf32>,
      %cst_25 = arith.constant 0.000000e+00 : f32
      %41 = vector.broadcast %cst_25 : f32 to vector<24x1xf32>
      %c0_26 = arith.constant 0 : index
      %c0_27 = arith.constant 0 : index
      %42 = vector.load %arg7[%c0_26, %c0_27] : memref<24x1xf32, #tpu.memory_space<vmem>>, vector<24x1xf32>
      tpu.vector_store %arg7[%c0_26, %c0_27], %41 {strides = array<i32>} : memref<24x1xf32, #tpu.memory_space<vmem>>, vector<24x1xf32>,
      %cst_28 = arith.constant 0.000000e+00 : f32
      %43 = vector.broadcast %cst_28 : f32 to vector<24x1xf32>
      %c0_29 = arith.constant 0 : index
      %c0_30 = arith.constant 0 : index
      %44 = vector.load %arg8[%c0_29, %c0_30] : memref<24x1xf32, #tpu.memory_space<vmem>>, vector<24x1xf32>
      tpu.vector_store %arg8[%c0_29, %c0_30], %43 {strides = array<i32>} : memref<24x1xf32, #tpu.memory_space<vmem>>, vector<24x1xf32>,
    } else {
    }
    %c0 = arith.constant 0 : index
    %c0_1 = arith.constant 0 : index
    %3 = vector.load %arg2[%c0, %c0_1] : memref<24x128xf32, #tpu.memory_space<vmem>>, vector<24x128xf32>
    %cst = arith.constant 1.000000e+01 : f32
    %4 = vector.broadcast %cst : f32 to vector<24x128xf32>
    %5 = arith.mulf %3, %4 : vector<24x128xf32>
    %6 = tpu.iota {dimensions = array<i32: 1>} : vector<24x128xi32>
    %c128_i32 = arith.constant 128 : i32
    %7 = arith.muli %arg1, %c128_i32 : i32
    %8 = vector.broadcast %7 : i32 to vector<24x128xi32>
    %9 = arith.addi %6, %8 : vector<24x128xi32>
    %c0_2 = arith.constant 0 : index
    %c0_3 = arith.constant 0 : index
    %10 = vector.load %arg3[%c0_2, %c0_3] : memref<24x1xi32, #tpu.memory_space<vmem>>, vector<24x1xi32>
    %11 = vector.broadcast %10 : vector<24x1xi32> to vector<24x128xi32>
    %12 = arith.cmpi eq, %9, %11 : vector<24x128xi32>
    %c0_4 = arith.constant 0 : index
    %c0_5 = arith.constant 0 : index
    %13 = vector.load %arg8[%c0_4, %c0_5] : memref<24x1xf32, #tpu.memory_space<vmem>>, vector<24x1xf32>
    %cst_6 = arith.constant 0.000000e+00 : f32
    %14 = vector.broadcast %cst_6 : f32 to vector<24x128xf32>
    %15 = arith.select %12, %5, %14 : vector<24x128xi1>, vector<24x128xf32>
    %cst_7 = arith.constant dense<0.000000e+00> : vector<24xf32>
    %16 = vector.multi_reduction <add>, %15, %cst_7 [1] : vector<24x128xf32> to vector<24xf32>
    %17 = vector.shape_cast %16 : vector<24xf32> to vector<24x1xf32>
    %18 = arith.addf %13, %17 : vector<24x1xf32>
    %c0_8 = arith.constant 0 : index
    %c0_9 = arith.constant 0 : index
    %19 = vector.load %arg8[%c0_8, %c0_9] : memref<24x1xf32, #tpu.memory_space<vmem>>, vector<24x1xf32>
    tpu.vector_store %arg8[%c0_8, %c0_9], %18 {strides = array<i32>} : memref<24x1xf32, #tpu.memory_space<vmem>>, vector<24x1xf32>,
    %c0_10 = arith.constant 0 : index
    %c0_11 = arith.constant 0 : index
    %20 = vector.load %arg6[%c0_10, %c0_11] : memref<24x1xf32, #tpu.memory_space<vmem>>, vector<24x1xf32>
    %cst_12 = arith.constant dense<0xFF800000> : vector<24xf32>
    %21 = vector.multi_reduction <maximumf>, %5, %cst_12 [1] : vector<24x128xf32> to vector<24xf32>
    %22 = vector.shape_cast %21 : vector<24xf32> to vector<24x1xf32>
    %23 = arith.maximumf %20, %22 : vector<24x1xf32>
    %24 = arith.subf %20, %23 : vector<24x1xf32>
    %25 = math.exp %24 : vector<24x1xf32>
    %c0_13 = arith.constant 0 : index
    %c0_14 = arith.constant 0 : index
    %26 = vector.load %arg7[%c0_13, %c0_14] : memref<24x1xf32, #tpu.memory_space<vmem>>, vector<24x1xf32>
    %27 = arith.mulf %25, %26 : vector<24x1xf32>
    %28 = vector.broadcast %23 : vector<24x1xf32> to vector<24x128xf32>
    %29 = arith.subf %5, %28 : vector<24x128xf32>
    %30 = math.exp %29 : vector<24x128xf32>
    %cst_15 = arith.constant dense<0.000000e+00> : vector<24xf32>
    %31 = vector.multi_reduction <add>, %30, %cst_15 [1] : vector<24x128xf32> to vector<24xf32>
    %32 = vector.shape_cast %31 : vector<24xf32> to vector<24x1xf32>
    %33 = arith.addf %27, %32 : vector<24x1xf32>
    %c0_16 = arith.constant 0 : index
    %c0_17 = arith.constant 0 : index
    %34 = vector.load %arg7[%c0_16, %c0_17] : memref<24x1xf32, #tpu.memory_space<vmem>>, vector<24x1xf32>
    tpu.vector_store %arg7[%c0_16, %c0_17], %33 {strides = array<i32>} : memref<24x1xf32, #tpu.memory_space<vmem>>, vector<24x1xf32>,
    %c0_18 = arith.constant 0 : index
    %c0_19 = arith.constant 0 : index
    %35 = vector.load %arg6[%c0_18, %c0_19] : memref<24x1xf32, #tpu.memory_space<vmem>>, vector<24x1xf32>
    tpu.vector_store %arg6[%c0_18, %c0_19], %23 {strides = array<i32>} : memref<24x1xf32, #tpu.memory_space<vmem>>, vector<24x1xf32>,
    %c0_i32_20 = arith.constant 0 : i32
    %36 = arith.cmpi eq, %arg1, %c0_i32_20 : i32
    %37 = arith.extui %36 : i1 to i32
    %c0_i32_21 = arith.constant 0 : i32
    %38 = arith.cmpi ne, %37, %c0_i32_21 : i32
    scf.if %38 {
      %c0_22 = arith.constant 0 : index
      %c0_23 = arith.constant 0 : index
      %39 = vector.load %arg6[%c0_22, %c0_23] : memref<24x1xf32, #tpu.memory_space<vmem>>, vector<24x1xf32>
      %c0_24 = arith.constant 0 : index
      %c0_25 = arith.constant 0 : index
      %40 = vector.load %arg7[%c0_24, %c0_25] : memref<24x1xf32, #tpu.memory_space<vmem>>, vector<24x1xf32>
      %41 = math.log %40 : vector<24x1xf32>
      %42 = arith.addf %39, %41 : vector<24x1xf32>
      %c0_26 = arith.constant 0 : index
      %c0_27 = arith.constant 0 : index
      %43 = vector.load %arg8[%c0_26, %c0_27] : memref<24x1xf32, #tpu.memory_space<vmem>>, vector<24x1xf32>
      %44 = arith.subf %42, %43 : vector<24x1xf32>
      %c0_28 = arith.constant 0 : index
      %c0_29 = arith.constant 0 : index
      %45 = vector.load %arg4[%c0_28, %c0_29] : memref<24x1xf32, #tpu.memory_space<vmem>>, vector<24x1xf32>
      %46 = arith.mulf %44, %45 : vector<24x1xf32>
      %47 = vector.shape_cast %46 : vector<24x1xf32> to vector<1x24x1xf32>
      %cst_30 = arith.constant dense<0.000000e+00> : vector<1xf32>
      %48 = vector.multi_reduction <add>, %47, %cst_30 [1, 2] : vector<1x24x1xf32> to vector<1xf32>
      %49 = vector.shape_cast %48 : vector<1xf32> to vector<1x1x1xf32>
      %50 = vector.extract %49[0, 0, 0] : f32 from vector<1x1x1xf32>
      %51 = tpu.iota {dimensions = array<i32: 0>} : vector<8x128xi32>
      %52 = tpu.iota {dimensions = array<i32: 1>} : vector<8x128xi32>
      %c0_i32_31 = arith.constant 0 : i32
      %53 = vector.broadcast %c0_i32_31 : i32 to vector<8x128xi32>
      %54 = arith.cmpi eq, %51, %53 : vector<8x128xi32>
      %c0_i32_32 = arith.constant 0 : i32
      %55 = vector.broadcast %c0_i32_32 : i32 to vector<8x128xi32>
      %56 = arith.cmpi eq, %52, %55 : vector<8x128xi32>
      %57 = arith.andi %54, %56 : vector<8x128xi1>
      %cst_33 = arith.constant 0.000000e+00 : f32
      %58 = vector.broadcast %50 : f32 to vector<8x128xf32>
      %59 = vector.broadcast %cst_33 : f32 to vector<8x128xf32>
      %60 = arith.select %57, %58, %59 : vector<8x128xi1>, vector<8x128xf32>
      %c0_34 = arith.constant 0 : index
      %c0_35 = arith.constant 0 : index
      %61 = vector.load %arg5[%c0_34, %c0_35] : memref<8x128xf32, #tpu.memory_space<vmem>>, vector<8x128xf32>
      tpu.vector_store %arg5[%c0_34, %c0_35], %60 {strides = array<i32>} : memref<8x128xf32, #tpu.memory_space<vmem>>, vector<8x128xf32>,
    } else {
    }
    return
  }
  func.func @transform_0(%arg0: i32, %arg1: i32) -> (i32, i32) {
    %c0_i32 = arith.constant 0 : i32
    return %arg0, %arg1 : i32, i32
  }
  func.func @transform_1(%arg0: i32, %arg1: i32) -> (i32, i32) {
    %c0_i32 = arith.constant 0 : i32
    %c0_i32_0 = arith.constant 0 : i32
    return %arg0, %c0_i32 : i32, i32
  }
  func.func @transform_2(%arg0: i32, %arg1: i32) -> (i32, i32) {
    %c0_i32 = arith.constant 0 : i32
    %c0_i32_0 = arith.constant 0 : i32
    return %arg0, %c0_i32 : i32, i32
  }
  func.func @transform_3(%arg0: i32, %arg1: i32) -> (i32, i32) {
    %c0_i32 = arith.constant 0 : i32
    %c0_i32_0 = arith.constant 0 : i32
    return %arg0, %c0_i32 : i32, i32
  }
}

</mosaic_0001>

<llo_original>
// kernel: tpu_custom_call.1
$region0: #{tpu_custom_call.1}
  #allocation0 [shape = 'u32[]', space=smem, size = 0x4, offset = 0x4, fixed_abs, tag = 'smem constant byte address 0x4 - core index']
  #allocation1 [shape = 'u32[144,128]{1,0:T(1,128)}', space=vmem, size = 0x12000, scoped, tag = 'internal scratch']
  #allocation2 [shape = 'f32[24,1]{1,0:T(8,128)}', space=vmem, size = 0x3000, scoped, tag = 'scratch operand']
  #allocation3 [shape = 'f32[24,1]{1,0:T(8,128)}', space=vmem, size = 0x3000, scoped, tag = 'scratch operand']
  #allocation4 [shape = 'f32[24,1]{1,0:T(8,128)}', space=vmem, size = 0x3000, scoped, tag = 'scratch operand']
  %s0 = inlined_call_operand.vmem [shape: f32[24,128], index: 0, kind: input, shape index: {}]
  %s1 = inlined_call_operand.vmem [shape: s32[24,1], index: 1, kind: input, shape index: {}]
  %s2 = inlined_call_operand.vmem [shape: f32[24,1], index: 2, kind: input, shape index: {}]
  %s3 = inlined_call_operand.hbm [shape: f32[8,128], index: 3, kind: output, shape index: {}]
  %s4 = sld [smem:[#allocation0]]
  $region30: #{tpu_custom_call.1} parent=0
    _
  %s6 = ssub.s32 1, %s4
  %s7 = scalar_select 0, %s6, %s4
  $region1: #{tpu_custom_call.1} parent=0
    #allocation5 [shape = 'u8[4096]{0}', space=vmem, size = 0x1000, scoped, tag = 'output window, operand 0, single buffered']
    #allocation6 [shape = 's32[1]{0}', space=sflag, size = 0x4, scoped, tag = 'scoped memory for tpu_custom_call.1']
    %8 = vsyncpa [#allocation6], 0
    // Predicated region
    $region2: #{tpu_custom_call.1} parent=1 // pred_check
      _
    $region3: #{tpu_custom_call.1} parent=1 // pred_check_branch
      %10 = sbr.rel (0) target = $region5
    $region4: #{tpu_custom_call.1} parent=1 // pred_region
      _
    $region5: #{tpu_custom_call.1} parent=1 // pred_fallthru
      _
    // Predicated region
    $region6: #{tpu_custom_call.1} parent=1 // pred_check
      _
    $region7: #{tpu_custom_call.1} parent=1 // pred_check_branch
      %12 = sbr.rel (0) target = $region9
    $region8: #{tpu_custom_call.1} parent=1 // pred_region
      _
    $region9: #{tpu_custom_call.1} parent=1 // pred_fallthru
      _
    // Predicated region
    $region10: #{tpu_custom_call.1} parent=1 // pred_check
      _
    $region11: #{tpu_custom_call.1} parent=1 // pred_check_branch
      %14 = sbr.rel (0) target = $region13
    $region12: #{tpu_custom_call.1} parent=1 // pred_region
      _
    $region13: #{tpu_custom_call.1} parent=1 // pred_fallthru
      _
    %p15 = scmp.eq.s32.totalorder 0, 0
    // Predicated region
    $region14: #{tpu_custom_call.1} parent=1 // pred_check
      %p16 = pneg %p15
    $region15: #{tpu_custom_call.1} parent=1 // pred_check_branch
      %18 = sbr.rel (%p16) target = $region17
    $region16: #{tpu_custom_call.1} parent=1 // pred_region
      %vm19 = vcmask 7168
      %20 = vst.msk [vmem:[#allocation2] sm:$0xff] %vm19, -inf
      %21 = vst.msk [vmem:[#allocation2 + $0x8] sm:$0xff] %vm19, -inf
      %22 = vst.msk [vmem:[#allocation2 + $0x10] sm:$0xff] %vm19, -inf
      %23 = vst.msk [vmem:[#allocation3] sm:$0xff] %vm19, 0.0
      %24 = vst.msk [vmem:[#allocation3 + $0x8] sm:$0xff] %vm19, 0.0
      %25 = vst.msk [vmem:[#allocation3 + $0x10] sm:$0xff] %vm19, 0.0
      %26 = vst.msk [vmem:[#allocation4] sm:$0xff] %vm19, 0.0
      %27 = vst.msk [vmem:[#allocation4 + $0x8] sm:$0xff] %vm19, 0.0
      %28 = vst.msk [vmem:[#allocation4 + $0x10] sm:$0xff] %vm19, 0.0
    $region17: #{tpu_custom_call.1} parent=1 // pred_fallthru
      _
    %v29 = vld [vmem:[%s0] sm:$0xff]
    %v30 = vld [vmem:[%s0 + $0x8] sm:$0xff]
    %v31 = vld [vmem:[%s0 + $0x10] sm:$0xff]
    %v32 = vmul.f32 %v29, 10.0
    %v33 = vmul.f32 %v30, 10.0
    %v34 = vmul.f32 %v31, 10.0
    %v35 = vlaneseq
    %v36 = vand.u32 %v35, 127
    %s37 = smul.u32 0, 128
    %v38 = vstv %s37
    %v39 = vadd.s32 %v36, %v38
    %v40 = vld [vmem:[%s1] sm:$0xff]
    %v41 = vld [vmem:[%s1 + $0x8] sm:$0xff]
    %v42 = vld [vmem:[%s1 + $0x10] sm:$0xff]
    %43 = vset.pattern.permute.xlu0 0
    %44 = vperm.xlu0 %43, %v40
    %v45 = vpop.permute.xlu0 %44
    %46 = vset.pattern.permute.xlu0 0
    %47 = vperm.xlu0 %46, %v41
    %v48 = vpop.permute.xlu0 %47
    %49 = vset.pattern.permute.xlu0 0
    %50 = vperm.xlu0 %49, %v42
    %v51 = vpop.permute.xlu0 %50
    %vm52 = vcmp.eq.s32.totalorder %v39, %v45
    %vm53 = vcmp.eq.s32.totalorder %v39, %v48
    %vm54 = vcmp.eq.s32.totalorder %v39, %v51
    %v55 = vld [vmem:[#allocation4] sm:$0xff]
    %v56 = vld [vmem:[#allocation4 + $0x8] sm:$0xff]
    %v57 = vld [vmem:[#allocation4 + $0x10] sm:$0xff]
    %v58 = vsel %vm52, %v32, 0.0
    %v59 = vsel %vm53, %v33, 0.0
    %v60 = vsel %vm54, %v34, 0.0
    %61 = vadd.xlane.f32.xlu0 %v58
    %v62 = vpop.xlane.xlu0 %61
    %63 = vadd.xlane.f32.xlu0 %v59
    %v64 = vpop.xlane.xlu0 %63
    %65 = vadd.xlane.f32.xlu0 %v60
    %v66 = vpop.xlane.xlu0 %65
    %v67 = vadd.f32 %v55, %v62
    %v68 = vadd.f32 %v56, %v64
    %v69 = vadd.f32 %v57, %v66
    %vm70 = vcmask 7168
    %71 = vst.msk [vmem:[#allocation4] sm:$0xff] %vm70, %v67
    %72 = vst.msk [vmem:[#allocation4 + $0x8] sm:$0xff] %vm70, %v68
    %73 = vst.msk [vmem:[#allocation4 + $0x10] sm:$0xff] %vm70, %v69
    %v74 = vld [vmem:[#allocation2] sm:$0xff]
    %v75 = vld [vmem:[#allocation2 + $0x8] sm:$0xff]
    %v76 = vld [vmem:[#allocation2 + $0x10] sm:$0xff]
    %77 = vmax.xlane.f32.xlu0 %v32
    %v78 = vpop.xlane.xlu0 %77
    %79 = vmax.xlane.f32.xlu0 %v33
    %v80 = vpop.xlane.xlu0 %79
    %81 = vmax.xlane.f32.xlu0 %v34
    %v82 = vpop.xlane.xlu0 %81
    %v83 = vmax.f32 %v74, %v78
    %v84 = vmax.f32 %v75, %v80
    %v85 = vmax.f32 %v76, %v82
    %v86 = vsub.f32 %v74, %v83
    %v87 = vsub.f32 %v75, %v84
    %v88 = vsub.f32 %v76, %v85
    %v89 = vmul.f32 %v86, 1.442695
    %v90 = vpow.pop %v89
    %v91 = vmul.f32 %v87, 1.442695
    %v92 = vpow.pop %v91
    %v93 = vmul.f32 %v88, 1.442695
    %v94 = vpow.pop %v93
    %v95 = vld [vmem:[#allocation3] sm:$0xff]
    %v96 = vld [vmem:[#allocation3 + $0x8] sm:$0xff]
    %v97 = vld [vmem:[#allocation3 + $0x10] sm:$0xff]
    %v98 = vmul.f32 %v90, %v95
    %v99 = vmul.f32 %v92, %v96
    %v100 = vmul.f32 %v94, %v97
    %102 = vset.pattern.permute.xlu0 0
    %103 = vperm.xlu0 %102, %v83
    %v104 = vpop.permute.xlu0 %103
    %107 = vset.pattern.permute.xlu0 0
    %108 = vperm.xlu0 %107, %v84
    %v109 = vpop.permute.xlu0 %108
    %112 = vset.pattern.permute.xlu0 0
    %113 = vperm.xlu0 %112, %v85
    %v114 = vpop.permute.xlu0 %113
    %v116 = vsub.f32 %v32, %v104
    %v117 = vsub.f32 %v33, %v109
    %v118 = vsub.f32 %v34, %v114
    %v119 = vmul.f32 %v116, 1.442695
    %v120 = vpow.pop %v119
    %v121 = vmul.f32 %v117, 1.442695
    %v122 = vpow.pop %v121
    %v123 = vmul.f32 %v118, 1.442695
    %v124 = vpow.pop %v123
    %125 = vadd.xlane.f32.xlu0 %v120
    %v126 = vpop.xlane.xlu0 %125
    %127 = vadd.xlane.f32.xlu0 %v122
    %v128 = vpop.xlane.xlu0 %127
    %129 = vadd.xlane.f32.xlu0 %v124
    %v130 = vpop.xlane.xlu0 %129
    %v131 = vadd.f32 %v98, %v126
    %v132 = vadd.f32 %v99, %v128
    %v133 = vadd.f32 %v100, %v130
    %134 = vst.msk [vmem:[#allocation3] sm:$0xff] %vm70, %v131
    %135 = vst.msk [vmem:[#allocation3 + $0x8] sm:$0xff] %vm70, %v132
    %136 = vst.msk [vmem:[#allocation3 + $0x10] sm:$0xff] %vm70, %v133
    %137 = vst.msk [vmem:[#allocation2] sm:$0xff] %vm70, %v83
    %138 = vst.msk [vmem:[#allocation2 + $0x8] sm:$0xff] %vm70, %v84
    %139 = vst.msk [vmem:[#allocation2 + $0x10] sm:$0xff] %vm70, %v85
    // Predicated region
    $region18: #{tpu_custom_call.1} parent=1 // pred_check
      %p140 = pneg %p15
    $region19: #{tpu_custom_call.1} parent=1 // pred_check_branch
      %142 = sbr.rel (%p140) target = $region21
    $region20: #{tpu_custom_call.1} parent=1 // pred_region
      %v143 = vld [vmem:[#allocation2] sm:$0xff]
      %v144 = vld [vmem:[#allocation2 + $0x8] sm:$0xff]
      %v145 = vld [vmem:[#allocation2 + $0x10] sm:$0xff]
      %v146 = vld [vmem:[#allocation3] sm:$0xff]
      %v147 = vld [vmem:[#allocation3 + $0x8] sm:$0xff]
      %v148 = vld [vmem:[#allocation3 + $0x10] sm:$0xff]
      %v149 = vlog2.pop %v146
      %v150 = vmul.f32 %v149, 0.6931472
      %v151 = vlog2.pop %v147
      %v152 = vmul.f32 %v151, 0.6931472
      %v153 = vlog2.pop %v148
      %v154 = vmul.f32 %v153, 0.6931472
      %v155 = vadd.f32 %v143, %v150
      %v156 = vadd.f32 %v144, %v152
      %v157 = vadd.f32 %v145, %v154
      %v158 = vld [vmem:[#allocation4] sm:$0xff]
      %v159 = vld [vmem:[#allocation4 + $0x8] sm:$0xff]
      %v160 = vld [vmem:[#allocation4 + $0x10] sm:$0xff]
      %v161 = vsub.f32 %v155, %v158
      %v162 = vsub.f32 %v156, %v159
      %v163 = vsub.f32 %v157, %v160
      %v164 = vld [vmem:[%s2] sm:$0xff]
      %v165 = vld [vmem:[%s2 + $0x8] sm:$0xff]
      %v166 = vld [vmem:[%s2 + $0x10] sm:$0xff]
      %v167 = vmul.f32 %v161, %v164
      %v168 = vmul.f32 %v162, %v165
      %v169 = vmul.f32 %v163, %v166
      %v170 = vsel %vm70, %v167, 0.0
      %v171 = vsel %vm70, %v168, 0.0
      %v172 = vadd.f32 %v170, %v171
      %v173 = vsel %vm70, %v169, 0.0
      %v174 = vadd.f32 %v172, %v173
      %175 = vadd.xlane.f32.xlu0 %v174
      %v176 = vpop.xlane.xlu0 %175
      %v177 = vrot.slane %v176, 4
      %v178 = vadd.f32 %v176, %v177
      %v179 = vrot.slane %v178, 2
      %v180 = vadd.f32 %v178, %v179
      %v181 = vrot.slane %v180, 1
      %v182 = vadd.f32 %v180, %v181
      %s183 = vtos %v182
      %v184 = vlaneseq
      %v185 = vshrl.u32 %v184, 7
      %vm186 = vcmp.eq.s32.totalorder %v185, 0
      %vm187 = vcmp.eq.s32.totalorder %v36, 0
      %vm188 = vmand %vm186, %vm187
      %v189 = vstv %s183
      %v190 = vsel %vm188, %v189, 0.0
      %191 = vst [vmem:[#allocation5] sm:$0xff] %v190
    $region21: #{tpu_custom_call.1} parent=1 // pred_fallthru
      _
    // Predicated region
    $region22: #{tpu_custom_call.1} parent=1 // pred_check
      _
    $region23: #{tpu_custom_call.1} parent=1 // pred_check_branch
      %193 = sbr.rel (0) target = $region25
    $region24: #{tpu_custom_call.1} parent=1 // pred_region
      %s195 = ssub.s32 128, 128
      %196 = vsyncadd [#allocation6], %s195
      %s198 = sshll.u32 [#allocation5], 4
      %s199 = int_to_ptr.vmem [resolvable:$true] %s198
      %201 = dma.vmem_to_hbm [thread:$0]  %s199, 128, %s3, [#allocation6]
    $region25: #{tpu_custom_call.1} parent=1 // pred_fallthru
      _
    // Predicated region
    $region26: #{tpu_custom_call.1} parent=1 // pred_check
      _
    $region27: #{tpu_custom_call.1} parent=1 // pred_check_branch
      %203 = sbr.rel (0) target = $region29
    $region28: #{tpu_custom_call.1} parent=1 // pred_region
      %204 = dma.done [#allocation6], 128
    $region29: #{tpu_custom_call.1} parent=1 // pred_fallthru
      _
    %205 = vsyncpa [#allocation6], 1

</llo_original>
